<compile_context>
chip_gen: v7x
topology: tpu7x:2x2x1
jax: 0.10.0
libtpu: 0.0.40
codegen_flags: <defaults>
</compile_context>

<pallas_src>
import functools
import struct

import jax
import jax.numpy as jnp
from jax.experimental import pallas as pl
from jax.experimental.pallas import tpu as pltpu


# ----------------------------------------------------------------------------
# helpers
# ----------------------------------------------------------------------------
def _cdiv(a, b):
    return -(-a // b)


def _round_up(x, m):
    return _cdiv(x, m) * m


def _f32_bits(x):
    return struct.unpack("<i", struct.pack("<f", float(x)))[0]


def _tpu_vmem_bytes(default_bytes=None):
    """Physical per-core VMEM.  `default_bytes` keys the fallback explicitly
    (pass 128 << 20 when AOT/mock-compiling for v5e/v6e without a device);
    otherwise fall back to the conservative v7x per-core value (64 MiB)."""
    if default_bytes is None:
        default_bytes = 64 << 20
    try:
        v = int(getattr(pltpu.get_tpu_info(), "vmem_capacity_bytes", default_bytes))
        return v if v > 0 else default_bytes
    except Exception:
        return default_bytes


def _clamp_vmem_limit(need, phys_vmem):
    # Generation-aware cap: ~48 MiB on 64 MiB parts (v7x), ~96 MiB on 128 MiB parts.
    cap = (phys_vmem * 3) // 4
    return int(max(16 << 20, min(need, cap)))


def _plan_f_tiles(F, d_global, vmem_bytes, n_splits):
    """Equalized F (contraction) tiles.  Budget ~vmem/4 for the double-buffered
    bf16 W_r tile -> ~32K rows on v7x (64 MiB), ~64K rows on v5e/v6e (128 MiB)."""
    f_pad0 = _round_up(F, 128)
    budget = vmem_bytes // 4
    tile_target = max(512, (budget // (2 * d_global * 2)) // 128 * 128)
    n_total = _round_up(max(n_splits, _cdiv(f_pad0, tile_target)), n_splits)
    f_tile = _round_up(_cdiv(f_pad0, n_total), 128)
    f_pad = n_total * f_tile
    return f_tile, f_pad, n_total // n_splits


def _plan_db_tiles(n_db, d_global, vmem_bytes):
    """Tile the database axis so db^T is streamed (never fully resident) and
    the scoring grid axis can be sharded across TensorCores."""
    ndb_pad0 = _round_up(n_db, 128)
    budget = vmem_bytes // 8
    tile_target = max(512, (budget // (2 * d_global * 2)) // 128 * 128)
    tile = min(tile_target, ndb_pad0)
    n_tiles = _cdiv(ndb_pad0, tile)
    tile = _round_up(_cdiv(ndb_pad0, n_tiles), 128)
    return tile, n_tiles * tile, n_tiles


# ----------------------------------------------------------------------------
# Kernel A: retrieval GEMV, F reduction sharded across TensorCores
# ----------------------------------------------------------------------------
def _retrieval_kernel(x_ref, w_ref, q_ref, acc_ref):
    k = pl.program_id(1)

    @pl.when(k == 0)
    def _init():
        acc_ref[...] = jnp.zeros_like(acc_ref)

    acc_ref[...] += jnp.dot(x_ref[...], w_ref[...],
                            preferred_element_type=jnp.float32)       # (1, Dg) f32

    @pl.when(k == pl.num_programs(1) - 1)
    def _finalize():
        q_ref[0] = acc_ref[...]


def _retrieval_gemv(x_pad, w_r, *, n_splits, nk, f_tile, vmem_limit):
    d_global = w_r.shape[1]
    return pl.pallas_call(
        _retrieval_kernel,
        out_shape=jax.ShapeDtypeStruct((n_splits, 1, d_global), jnp.float32),
        grid=(n_splits, nk),
        in_specs=[
            pl.BlockSpec((1, f_tile), lambda c, k: (0, c * nk + k)),       # x (bf16)
            # W_r tile (bf16); pl.Buffered(3) is a sweep candidate once f_tile is fixed.
            pl.BlockSpec((f_tile, d_global), lambda c, k: (c * nk + k, 0)),
        ],
        out_specs=pl.BlockSpec((1, 1, d_global), lambda c, k: (c, 0, 0)),  # per-core partial
        scratch_shapes=[pltpu.VMEM((1, d_global), jnp.float32)],
        compiler_params=pltpu.CompilerParams(
            dimension_semantics=("parallel", "arbitrary"),   # core-shard F, reduce over k
            vmem_limit_bytes=vmem_limit,
        ),
    )(x_pad, w_r)


# ----------------------------------------------------------------------------
# Kernel B: pairs_from_retrieval scoring with streamed db^T + in-kernel masking
# ----------------------------------------------------------------------------
def _score_kernel(sidx_ref, qp_ref, dbt_ref, out_ref, *, n_db, ndb_tile):
    j = pl.program_id(0)
    # combine per-core partial sums of the F reduction, then L2-normalize (EUP rsqrt)
    q = jnp.sum(qp_ref[...], axis=0)                                    # (1, Dg)
    q = q * jax.lax.rsqrt(jnp.sum(q * q, axis=-1, keepdims=True) + 1e-12)
    s = jnp.dot(q.astype(jnp.bfloat16), dbt_ref[...],
                preferred_element_type=jnp.float32)                     # (1, ndb_tile)
    lane = jax.lax.broadcasted_iota(jnp.int32, s.shape, 1) + j * ndb_tile
    invalid = lane >= n_db                                              # padded db columns
    invalid |= lane == sidx_ref[0]                                      # self-match (query 0)
    # min_score threshold as f32 bits (sentinel -inf disables the filter)
    min_f = pltpu.bitcast(jnp.full(s.shape, sidx_ref[1], dtype=jnp.int32), jnp.float32)
    invalid |= s < min_f
    out_ref[...] = jnp.where(invalid, -jnp.inf, s)


def _pairs_from_retrieval(sidx, q_part, db_t, *, n_db, ndb_tile, n_tiles, vmem_limit):
    n_splits, _, d_global = q_part.shape
    ndb_pad = db_t.shape[1]
    return pl.pallas_call(
        functools.partial(_score_kernel, n_db=n_db, ndb_tile=ndb_tile),
        out_shape=jax.ShapeDtypeStruct((1, ndb_pad), jnp.float32),
        grid_spec=pltpu.PrefetchScalarGridSpec(
            num_scalar_prefetch=1,                    # [match_idx, min_score_bits] (SMEM)
            grid=(n_tiles,),
            in_specs=[
                # grid-invariant partials: single-buffered (no redundant 2nd buffer)
                pl.BlockSpec((n_splits, 1, d_global), lambda j, sidx: (0, 0, 0),
                             pipeline_mode=pl.Buffered(1)),
                pl.BlockSpec((d_global, ndb_tile), lambda j, sidx: (0, j)),   # db^T streamed
            ],
            out_specs=pl.BlockSpec((1, ndb_tile), lambda j, sidx: (0, j)),    # lane-dense
        ),
        compiler_params=pltpu.CompilerParams(
            dimension_semantics=("parallel",),        # shard Ndb tiles across cores
            vmem_limit_bytes=vmem_limit,
        ),
    )(sidx, q_part, db_t)


# ----------------------------------------------------------------------------
# Kernel C: local keypoint head (tiny, fully resident, single invocation)
# ----------------------------------------------------------------------------
def _keypoint_kernel(px_ref, wd_ref, ws_ref, desc_ref, kps_ref):
    d = jnp.dot(px_ref[...], wd_ref[...], preferred_element_type=jnp.float32)  # (K_pad, Dd)
    dn = d * jax.lax.rsqrt(jnp.sum(d * d, axis=-1, keepdims=True) + 1e-12)     # EUP
    desc_ref[...] = dn
    # score head: (1,Dd) . (K_pad,Dd)^T -> lane-dense (1, K_pad) row store
    s = jax.lax.dot_general(ws_ref[...], dn,
                            dimension_numbers=(((1,), (1,)), ((), ())),
                            preferred_element_type=jnp.float32)
    kps_ref[...] = jax.nn.sigmoid(s)


def _keypoint_head(px_pad, w_d, w_s):
    k_pad = px_pad.shape[0]
    d_local = w_d.shape[1]
    return pl.pallas_call(
        _keypoint_kernel,
        out_shape=(jax.ShapeDtypeStruct((k_pad, d_local), jnp.float32),
                   jax.ShapeDtypeStruct((1, k_pad), jnp.float32)),
    )(px_pad, w_d, w_s)


# ----------------------------------------------------------------------------
# JAX port of LocalizationModule (synthetic retrieval / keypoint heads)
# ----------------------------------------------------------------------------
class LocalizationModuleJAX:
    # Leading "parallel" grid axis of kernel A: shards the F reduction across
    # TensorCores on v7x (2 TC/chip); a harmless serial loop on v5e/v6e (1 TC).
    N_F_SPLITS = 2

    def __init__(self, key, C, H, W, n_db, d_global=128, d_local=128, n_kp=64,
                 num_retrieval=4, min_score=-1, default_vmem_bytes=None):
        assert d_global % 128 == 0 and d_local % 128 == 0
        k1, k2, k3, k4 = jax.random.split(key, 4)
        F = C * H * W
        self.C, self.H, self.W, self.n_kp = C, H, W, n_kp
        self.n_db, self.num_retrieval, self.min_score = n_db, num_retrieval, min_score
        self.d_global, self.d_local = d_global, d_local

        vmem = _tpu_vmem_bytes(default_vmem_bytes)
        self.f_tile, self.f_pad, self.nk = _plan_f_tiles(F, d_global, vmem, self.N_F_SPLITS)
        self.ndb_tile, self.ndb_pad, self.n_db_tiles = _plan_db_tiles(n_db, d_global, vmem)
        self.k_pad = _round_up(n_kp, 128)
        self.c_pad = _round_up(C, 8)

        # vmem limits, with the true buffer counts (Buffered(1) invariants counted once)
        pipelined_a = 2 * (self.f_tile * 2 + self.f_tile * d_global * 2)   # x(bf16)+W_r(bf16)
        resident_a = 2 * self.N_F_SPLITS * d_global * 4 + d_global * 4     # q_part out + acc
        self.vmem_limit_retrieval = _clamp_vmem_limit(
            int(1.5 * (pipelined_a + resident_a)) + (2 << 20), vmem)
        pipelined_b = 2 * (d_global * self.ndb_tile * 2 + self.ndb_tile * 4)  # db^T + scores
        resident_b = self.N_F_SPLITS * d_global * 4                           # q_part (x1)
        self.vmem_limit_score = _clamp_vmem_limit(
            int(1.5 * (pipelined_b + resident_b)) + (2 << 20), vmem)

        # big matmul operands stored in bf16 (halves HBM traffic; MXU-native)
        w_r = jax.random.normal(k1, (F, d_global), jnp.float32) * 0.02
        self.w_retrieval = jnp.pad(w_r, ((0, self.f_pad - F), (0, 0))).astype(jnp.bfloat16)
        w_d = jax.random.normal(k2, (C, d_local), jnp.float32) * 0.5
        self.w_desc = jnp.pad(w_d, ((0, self.c_pad - C), (0, 0))).astype(jnp.bfloat16)
        self.w_score = jax.random.normal(k3, (1, d_local), jnp.float32) * 0.5

        # database retrieval descriptors: normalized in f32, stored pre-transposed
        # (Dg, Ndb_pad) bf16; padded columns are masked to -inf inside the kernel.
        db = jax.random.normal(k4, (n_db, d_global), jnp.float32)
        db = db / jnp.linalg.norm(db, axis=-1, keepdims=True)
        self.db_features = db
        self.db_t = jnp.pad(db.T, ((0, 0), (0, self.ndb_pad - n_db))).astype(jnp.bfloat16)
        self.db_names = [f"db/img_{i:03d}.png" for i in range(n_db)]

    # ---- deterministic grid keypoints + pixel gather (glue) ------------------
    def _keypoints_and_pixels(self, image):
        side = int(self.n_kp ** 0.5)
        ys = (jnp.arange(side) * (self.H // side)).astype(jnp.int32)
        xs = (jnp.arange(side) * (self.W // side)).astype(jnp.int32)
        yy, xx = jnp.meshgrid(ys, xs, indexing="ij")
        kps = jnp.stack([xx.reshape(-1), yy.reshape(-1)], axis=-1).astype(jnp.float32)
        px = image[:, yy.reshape(-1), xx.reshape(-1)].T.astype(jnp.bfloat16)   # (K, C) bf16
        px_pad = jnp.pad(px, ((0, self.k_pad - self.n_kp), (0, self.c_pad - self.C)))
        return kps, px_pad

    # ---- retrieval + local features + pairs scoring ---------------------------
    def localize(self, query_image, db_name="tmp"):
        # TODO(synk): if the serving path ever batches queries, lift nq=1 to M rows so
        # W_r is streamed once per batch instead of once per query (near-linear win).
        F = self.C * self.H * self.W
        x_pad = jnp.pad(query_image.reshape(1, -1).astype(jnp.bfloat16),   # pre-cast bf16
                        ((0, 0), (0, self.f_pad - F)))
        kps, px_pad = self._keypoints_and_pixels(query_image)

        # self-match exclusion index for the (single) query; -1 -> no shared name.
        midx = self.db_names.index(db_name) if db_name in self.db_names else -1
        # min_score as f32 bits; torch sentinel -1 -> -inf (filter disabled), so
        # fractional thresholds are honored without recompiling per value.
        minv = float(self.min_score) if self.min_score != -1 else float("-inf")
        sidx = jnp.array([midx, _f32_bits(minv)], jnp.int32)

        q_part = _retrieval_gemv(x_pad, self.w_retrieval,
                                 n_splits=self.N_F_SPLITS, nk=self.nk,
                                 f_tile=self.f_tile,
                                 vmem_limit=self.vmem_limit_retrieval)
        masked = _pairs_from_retrieval(sidx, q_part, self.db_t,
                                       n_db=self.n_db, ndb_tile=self.ndb_tile,
                                       n_tiles=self.n_db_tiles,
                                       vmem_limit=self.vmem_limit_score)
        desc, kp_row = _keypoint_head(px_pad, self.w_desc, self.w_score)
        return (masked[:, :self.n_db], desc[:self.n_kp],
                kp_row[0, :self.n_kp], kps)

    # ---- match_features -------------------------------------------------------
    def match_features(self, topk_vals):
        # TODO(synk): the external matcher model inference and the PnP/RANSAC pose
        # solve (pnp_solver.pnp_solve) are black-box geometric solvers with no clean
        # Pallas equivalent; R/t are identity/zero placeholders, the score slot
        # carries the retrieval score, and non-finite (fully-masked) entries are
        # zeroed, mirroring torch's `valid = topk.values.isfinite()` filtering.
        n = topk_vals.shape[0]
        R = jnp.broadcast_to(jnp.eye(3, dtype=jnp.float32), (n, 3, 3))
        t = jnp.zeros((n, 3), jnp.float32)
        scores = jnp.where(jnp.isfinite(topk_vals), topk_vals, 0.0).astype(jnp.float32)
        return R, t, scores

    # ---- forward --------------------------------------------------------------
    def forward(self, query_image, intrinsics):
        masked_scores, _desc, _kp_scores, _kps = self.localize(query_image)
        vals, _idx = jax.lax.top_k(masked_scores, self.num_retrieval)   # small-k glue
        R, t, scores = self.match_features(vals[0])
        # torch.cat([R.reshape((-1, 9)), t, scores.unsqueeze(1)], dim=1)
        return jnp.concatenate([R.reshape(-1, 9), t, scores[:, None]], axis=1)


# ----------------------------------------------------------------------------
if __name__ == "__main__":
    key = jax.random.PRNGKey(0)
    k_mod, k_img = jax.random.split(key)

    C, H, W = 4, 16, 16
    query_image = jax.random.normal(k_img, (C, H, W), jnp.float32)
    intrinsics = jnp.array([[100.0, 0.0, 8.0],
                            [0.0, 100.0, 8.0],
                            [0.0, 0.0, 1.0]], jnp.float32)

    module = LocalizationModuleJAX(k_mod, C, H, W, n_db=16,
                                   d_global=128, d_local=128, n_kp=64,
                                   num_retrieval=4)

    masked, desc, kp_scores, kps = module.localize(query_image)
    masked, desc, kp_scores = jax.block_until_ready((masked, desc, kp_scores))

    # ---- pure-JAX reference of the kernels (same dtypes / padding) ------------
    F = C * H * W
    x_pad = jnp.pad(query_image.reshape(1, -1).astype(jnp.bfloat16),
                    ((0, 0), (0, module.f_pad - F)))
    q = jnp.dot(x_pad, module.w_retrieval, preferred_element_type=jnp.float32)
    qn = q * jax.lax.rsqrt(jnp.sum(q * q, -1, keepdims=True) + 1e-12)
    ref_scores = jnp.dot(qn.astype(jnp.bfloat16), module.db_t,
                         preferred_element_type=jnp.float32)[:, :module.n_db]
    _, px_pad = module._keypoints_and_pixels(query_image)
    d = jnp.dot(px_pad, module.w_desc, preferred_element_type=jnp.float32)
    dn = d * jax.lax.rsqrt(jnp.sum(d * d, -1, keepdims=True) + 1e-12)
    ref_desc = dn[:module.n_kp]
    ref_kp = jax.nn.sigmoid(dn @ module.w_score[0])[:module.n_kp]

    assert jnp.all(jnp.isfinite(masked)), "unexpected masked entries"
    assert jnp.allclose(masked, ref_scores, atol=2e-2, rtol=2e-2), "retrieval scores mismatch"
    assert jnp.allclose(desc, ref_desc, atol=2e-2, rtol=2e-2), "descriptor mismatch"
    assert jnp.allclose(kp_scores, ref_kp, atol=2e-2, rtol=2e-2), "keypoint score mismatch"

    out = module.forward(query_image, intrinsics)
    out = jax.block_until_ready(out)
    assert out.shape == (4, 13), out.shape
    assert bool(jnp.all(jnp.isfinite(out)))
    print("KERNEL_OK")
</pallas_src>

<mosaic_0001>
module attributes {stable_mosaic.version = 11 : i64} {
  func.func @_retrieval_kernel(%arg0: i32, %arg1: i32, %arg2: memref<1x512xbf16, #tpu.memory_space<vmem>>, %arg3: memref<512x128xbf16, #tpu.memory_space<vmem>>, %arg4: memref<1x1x128xf32, #tpu.memory_space<vmem>>, %arg5: memref<1x128xf32, #tpu.memory_space<vmem>>) attributes {dimension_semantics = [#tpu.dimension_semantics<parallel>, #tpu.dimension_semantics<arbitrary>], iteration_bounds = array<i64: 2, 1>, scalar_prefetch = 0 : i64, scratch_operands = 1 : i64, tpu.core_type = #tpu.core_type<tc>, window_params = [{transform_indices = @transform_0, window_bounds = array<i64: 1, 512>}, {transform_indices = @transform_1, window_bounds = array<i64: 512, 128>}, {transform_indices = @transform_2, window_bounds = array<i64: 1, 1, 128>}]} {
    %c0_i32 = arith.constant 0 : i32
    %0 = arith.cmpi eq, %arg1, %c0_i32 : i32
    %1 = arith.extui %0 : i1 to i32
    %c0_i32_0 = arith.constant 0 : i32
    %2 = arith.cmpi ne, %1, %c0_i32_0 : i32
    scf.if %2 {
      %cst_10 = arith.constant 0.000000e+00 : f32
      %12 = vector.broadcast %cst_10 : f32 to vector<1x128xf32>
      %c0_11 = arith.constant 0 : index
      %c0_12 = arith.constant 0 : index
      %13 = vector.load %arg5[%c0_11, %c0_12] : memref<1x128xf32, #tpu.memory_space<vmem>>, vector<1x128xf32>
      tpu.vector_store %arg5[%c0_11, %c0_12], %12 {strides = array<i32>} : memref<1x128xf32, #tpu.memory_space<vmem>>, vector<1x128xf32>,
    } else {
    }
    %c0 = arith.constant 0 : index
    %c0_1 = arith.constant 0 : index
    %3 = vector.load %arg5[%c0, %c0_1] : memref<1x128xf32, #tpu.memory_space<vmem>>, vector<1x128xf32>
    %c0_2 = arith.constant 0 : index
    %c0_3 = arith.constant 0 : index
    %4 = vector.load %arg2[%c0_2, %c0_3] : memref<1x512xbf16, #tpu.memory_space<vmem>>, vector<1x512xbf16>
    %c0_4 = arith.constant 0 : index
    %c0_5 = arith.constant 0 : index
    %5 = vector.load %arg3[%c0_4, %c0_5] : memref<512x128xbf16, #tpu.memory_space<vmem>>, vector<512x128xbf16>
    %cst = arith.constant dense<0.000000e+00> : vector<1x128xf32>
    %6 = tpu.matmul %4, %5, %cst {dimension_numbers = #tpu.dot_dimension_numbers<[1], [0], [0], [1], [0, 0, 1, 1], [], []>} : vector<1x512xbf16>, vector<512x128xbf16>, vector<1x128xf32> -> vector<1x128xf32>
    %7 = arith.addf %3, %6 : vector<1x128xf32>
    %c0_6 = arith.constant 0 : index
    %c0_7 = arith.constant 0 : index
    %8 = vector.load %arg5[%c0_6, %c0_7] : memref<1x128xf32, #tpu.memory_space<vmem>>, vector<1x128xf32>
    tpu.vector_store %arg5[%c0_6, %c0_7], %7 {strides = array<i32>} : memref<1x128xf32, #tpu.memory_space<vmem>>, vector<1x128xf32>,
    %c0_i32_8 = arith.constant 0 : i32
    %9 = arith.cmpi eq, %arg1, %c0_i32_8 : i32
    %10 = arith.extui %9 : i1 to i32
    %c0_i32_9 = arith.constant 0 : i32
    %11 = arith.cmpi ne, %10, %c0_i32_9 : i32
    scf.if %11 {
      %c0_10 = arith.constant 0 : index
      %c0_11 = arith.constant 0 : index
      %12 = vector.load %arg5[%c0_10, %c0_11] : memref<1x128xf32, #tpu.memory_space<vmem>>, vector<1x128xf32>
      %c0_12 = arith.constant 0 : index
      %c0_13 = arith.constant 0 : index
      %c0_14 = arith.constant 0 : index
      %13 = vector.load %arg4[%c0_12, %c0_13, %c0_14] : memref<1x1x128xf32, #tpu.memory_space<vmem>>, vector<1x1x128xf32>
      %14 = vector.shape_cast %13 : vector<1x1x128xf32> to vector<1x128xf32>
      %15 = vector.shape_cast %12 : vector<1x128xf32> to vector<1x1x128xf32>
      tpu.vector_store %arg4[%c0_12, %c0_13, %c0_14], %15 {strides = array<i32>} : memref<1x1x128xf32, #tpu.memory_space<vmem>>, vector<1x1x128xf32>,
    } else {
    }
    return
  }
  func.func @transform_0(%arg0: i32, %arg1: i32) -> (i32, i32) {
    %c1_i32 = arith.constant 1 : i32
    %0 = arith.muli %arg0, %c1_i32 : i32
    %1 = arith.addi %0, %arg1 : i32
    %c0_i32 = arith.constant 0 : i32
    %c0_i32_0 = arith.constant 0 : i32
    return %c0_i32, %1 : i32, i32
  }
  func.func @transform_1(%arg0: i32, %arg1: i32) -> (i32, i32) {
    %c1_i32 = arith.constant 1 : i32
    %0 = arith.muli %arg0, %c1_i32 : i32
    %1 = arith.addi %0, %arg1 : i32
    %c0_i32 = arith.constant 0 : i32
    %c0_i32_0 = arith.constant 0 : i32
    return %1, %c0_i32 : i32, i32
  }
  func.func @transform_2(%arg0: i32, %arg1: i32) -> (i32, i32, i32) {
    %c0_i32 = arith.constant 0 : i32
    %c0_i32_0 = arith.constant 0 : i32
    %c0_i32_1 = arith.constant 0 : i32
    return %arg0, %c0_i32, %c0_i32_0 : i32, i32, i32
  }
}

</mosaic_0001>

<llo_original>
// kernel: tpu_custom_call.1
$region0: #{tpu_custom_call.1}
  #allocation0 [shape = 'u32[]', space=smem, size = 0x4, offset = 0x4, fixed_abs, tag = 'smem constant byte address 0x4 - core index']
  #allocation1 [shape = 'u32[144,128]{1,0:T(1,128)}', space=vmem, size = 0x12000, scoped, tag = 'internal scratch']
  #allocation2 [shape = 'f32[1,128]{1,0:T(1,128)}', space=vmem, size = 0x200, scoped, tag = 'scratch operand']
  %s0 = inlined_call_operand.hbm [shape: bf16[1,1024], index: 0, kind: input, shape index: {}]
  %s1 = inlined_call_operand.hbm [shape: bf16[1024,128], index: 1, kind: input, shape index: {}]
  %s2 = inlined_call_operand.hbm [shape: f32[2,1,128], index: 2, kind: output, shape index: {}]
  %s3 = sld [smem:[#allocation0]]
  $region57: #{tpu_custom_call.1} parent=0
    _
  %s5 = ssub.s32 1, %s3
  %s6 = scalar_select 0, %s5, %s3
  $region1: #{tpu_custom_call.1} parent=0
    #allocation3 [shape = 'u8[4096]{0}', space=vmem, size = 0x1000, scoped, tag = 'input window, operand 0']
    #allocation4 [shape = 's32[2]{0}', space=sflag, size = 0x8, scoped, tag = 'scoped memory for tpu_custom_call.1']
    #allocation5 [shape = 's32[2]{0}', space=sflag, size = 0x8, scoped, tag = 'scoped memory for tpu_custom_call.1']
    #allocation6 [shape = 'u8[262144]{0}', space=vmem, size = 0x40000, scoped, tag = 'input window, operand 1']
    #allocation7 [shape = 's32[2]{0}', space=sflag, size = 0x8, scoped, tag = 'scoped memory for tpu_custom_call.1']
    #allocation8 [shape = 'u8[1024]{0}', space=vmem, size = 0x400, scoped, tag = 'output window, operand 0']
    %7 = vsyncpa [#allocation4], 0
    %s8 = scalar_lea.sflag [#allocation4], 1
    %9 = vsyncpa %s8, 0
    %10 = vsyncpa [#allocation7], 0
    %s11 = scalar_lea.sflag [#allocation7], 1
    %12 = vsyncpa %s11, 0
    %13 = vsyncpa [#allocation5], 0
    %s14 = scalar_lea.sflag [#allocation5], 1
    %15 = vsyncpa %s14, 0
    loop: start=0, step=1, limit=4
    $region2: #{tpu_custom_call.1} parent=1 // loop_pre_header
      _
    $region3: #{tpu_custom_call.1} parent=1 // loop_header
      %s17 = sphi 0, %s21
      %p18 = scmp.ge.s32.totalorder %s17, 4
      %s24 = sphi 0, %s36
      %s25 = sphi 0, %s32
      %s26 = sphi 0, %s24
      %s27 = sphi 0, %s25
      %s28 = sphi 0, %s26
      %s29 = sphi 0, %s27
      %s41 = sphi 0, %s43
      %s44 = sphi 0, %s41
      %s45 = sphi 0, %s44
      %s61 = sphi 0, %s45
      %s69 = sphi 0, %s71
      %s72 = sphi 0, %s69
      %s73 = sphi 0, %s72
      %s89 = sphi 0, %s73
      %s95 = sphi 0, %s97
      %s98 = sphi 0, %s95
      %s99 = sphi 0, %s98
      %s115 = sphi 0, %s99
    $region4: #{tpu_custom_call.1} parent=1 // loop_header_branch
      %20 = sbr.rel (%p18) target = $region8
    $region5: #{tpu_custom_call.1} parent=1 // loop_body
      %s22 = ssub.s32 %s17, 1
      %s23 = ssub.s32 %s17, 2
      %s30 = sadd.s32 1, %s25
      %p31 = scmp.ge.s32.totalorder %s30, 1
      %s32 = scalar_select %p31, 0, %s30
      %s33 = sadd.s32 1, %s24
      %s34 = scalar_select %p31, %s33, %s24
      %p35 = scmp.ge.s32.totalorder %s34, 2
      %s36 = scalar_select %p35, 0, %s34
      %s37 = sadd.s32 %s24, %s25
      %s38 = sadd.s32 %s36, %s32
      %s39 = ssub.s32 %s37, %s38
      %p40 = scmp.eq.s32.totalorder %s39, 0
      %s42 = sadd.s32 %s41, 1
      %s43 = scalar_select %p40, %s41, %s42
      %p46 = pneg %p40
      %p47 = scmp.eq.s32.totalorder %s17, 1
      %p48 = por %p46, %p47
      %p49 = scmp.ne.s32.totalorder %s41, %s44
      %p50 = scmp.eq.s32.totalorder %s17, 0
      %p51 = por %p49, %p50
      %p52 = scmp.ne.s32.totalorder %s41, %s44
      %p53 = scmp.eq.s32.totalorder %s22, 1
      %p54 = por %p52, %p53
      %p55 = scmp.ne.s32.totalorder %s44, %s45
      %p56 = scmp.eq.s32.totalorder %s22, 0
      %p57 = por %p55, %p56
      %p58 = scmp.ne.s32.totalorder %s44, %s45
      %p59 = scmp.eq.s32.totalorder %s23, 1
      %p60 = por %p58, %p59
      %p62 = scmp.ne.s32.totalorder %s45, %s61
      %p63 = scmp.eq.s32.totalorder %s23, 0
      %p64 = por %p62, %p63
      %s65 = sadd.s32 %s24, %s25
      %s66 = sadd.s32 %s36, %s32
      %s67 = ssub.s32 %s65, %s66
      %p68 = scmp.eq.s32.totalorder %s67, 0
      %s70 = sadd.s32 %s69, 1
      %s71 = scalar_select %p68, %s69, %s70
      %p74 = pneg %p68
      %p75 = scmp.eq.s32.totalorder %s17, 1
      %p76 = por %p74, %p75
      %p77 = scmp.ne.s32.totalorder %s69, %s72
      %p78 = scmp.eq.s32.totalorder %s17, 0
      %p79 = por %p77, %p78
      %p80 = scmp.ne.s32.totalorder %s69, %s72
      %p81 = scmp.eq.s32.totalorder %s22, 1
      %p82 = por %p80, %p81
      %p83 = scmp.ne.s32.totalorder %s72, %s73
      %p84 = scmp.eq.s32.totalorder %s22, 0
      %p85 = por %p83, %p84
      %p86 = scmp.ne.s32.totalorder %s72, %s73
      %p87 = scmp.eq.s32.totalorder %s23, 1
      %p88 = por %p86, %p87
      %p90 = scmp.ne.s32.totalorder %s73, %s89
      %p91 = scmp.eq.s32.totalorder %s23, 0
      %p92 = por %p90, %p91
      %s93 = ssub.s32 %s24, %s36
      %p94 = scmp.eq.s32.totalorder %s93, 0
      %s96 = sadd.s32 %s95, 1
      %s97 = scalar_select %p94, %s95, %s96
      %p100 = pneg %p94
      %p101 = scmp.eq.s32.totalorder %s17, 1
      %p102 = por %p100, %p101
      %p103 = scmp.ne.s32.totalorder %s95, %s98
      %p104 = scmp.eq.s32.totalorder %s17, 0
      %p105 = por %p103, %p104
      %p106 = scmp.ne.s32.totalorder %s95, %s98
      %p107 = scmp.eq.s32.totalorder %s22, 1
      %p108 = por %p106, %p107
      %p109 = scmp.ne.s32.totalorder %s98, %s99
      %p110 = scmp.eq.s32.totalorder %s22, 0
      %p111 = por %p109, %p110
      %p112 = scmp.ne.s32.totalorder %s98, %s99
      %p113 = scmp.eq.s32.totalorder %s23, 1
      %p114 = por %p112, %p113
      %p116 = scmp.ne.s32.totalorder %s99, %s115
      %p117 = scmp.eq.s32.totalorder %s23, 0
      %p118 = por %p116, %p117
      %p119 = scmp.le.s32.totalorder 1, %s17
      %p120 = scmp.lt.s32.totalorder %s17, 3
      %p121 = pnand %p119, %p120
      %p122 = pneg %p121
      // Predicated region
      $region9: #{tpu_custom_call.1} parent=5 // pred_check
        _
      $region10: #{tpu_custom_call.1} parent=5 // pred_check_branch
        %124 = sbr.rel (%p121) target = $region12
      $region11: #{tpu_custom_call.1} parent=5 // pred_region
        %s125 = ssub.s32 %s17, 1
      $region12: #{tpu_custom_call.1} parent=5 // pred_fallthru
        _
      %p126 = scmp.lt.s32.totalorder %s17, 2
      // Predicated region
      $region13: #{tpu_custom_call.1} parent=5 // pred_check
        %p127 = pneg %p126
      $region14: #{tpu_custom_call.1} parent=5 // pred_check_branch
        %129 = sbr.rel (%p127) target = $region16
      $region15: #{tpu_custom_call.1} parent=5 // pred_region
        // Predicated region
        $region17: #{tpu_custom_call.1} parent=15 // pred_check
          %p130 = pneg %p51
        $region18: #{tpu_custom_call.1} parent=15 // pred_check_branch
          %132 = sbr.rel (%p130) target = $region20
        $region19: #{tpu_custom_call.1} parent=15 // pred_region
          %s133 = sand.u32 %s41, 1
          %s134 = scalar_lea.sflag [#allocation4], %s133
          %s135 = sand.u32 %s41, 1
          %s136 = smul.addr %s135, 4
          %s137 = scalar_lea.vmem [#allocation3], %s136
          %s138 = sadd.s32 %s24, %s25
          %s139 = smul.u32 4, %s138
          %s141 = ssub.s32 64, 64
          %142 = vsyncadd %s134, %s141
          %s143 = smul.addr %s139, 16
          %s144 = scalar_lea.hbm %s0, %s143
          %s146 = sshll.u32 %s137, 4
          %s147 = int_to_ptr.vmem [resolvable:$true] %s146
          %149 = dma.hbm_to_vmem [thread:$0]  %s144, 64, %s147, %s134
        $region20: #{tpu_custom_call.1} parent=15 // pred_fallthru
          _
        // Predicated region
        $region21: #{tpu_custom_call.1} parent=15 // pred_check
          %p150 = pneg %p79
        $region22: #{tpu_custom_call.1} parent=15 // pred_check_branch
          %152 = sbr.rel (%p150) target = $region24
        $region23: #{tpu_custom_call.1} parent=15 // pred_region
          %s153 = sand.u32 %s69, 1
          %s154 = scalar_lea.sflag [#allocation7], %s153
          %s155 = sand.u32 %s69, 1
          %s156 = smul.addr %s155, 256
          %s157 = scalar_lea.vmem [#allocation6], %s156
          %s158 = sadd.s32 %s24, %s25
          %s159 = smul.u32 64, %s158
          %s161 = ssub.s32 4096, 4096
          %162 = vsyncadd %s154, %s161
          %s163 = smul.addr %s159, 64
          %s164 = scalar_lea.hbm %s1, %s163
          %s165 = sshll.u32 %s157, 4
          %s166 = int_to_ptr.vmem [resolvable:$true] %s165
          %171 = dma.hbm_to_vmem [thread:$0]  %s164, 4096, %s166, %s154, 64, 64, 4
        $region24: #{tpu_custom_call.1} parent=15 // pred_fallthru
          _
      $region16: #{tpu_custom_call.1} parent=5 // pred_fallthru
        _
      %p172 = scmp.le.s32.totalorder 1, %s17
      %p173 = scmp.lt.s32.totalorder %s17, 3
      %p174 = pnand %p172, %p173
      %p175 = pneg %p174
      // Predicated region
      $region25: #{tpu_custom_call.1} parent=5 // pred_check
        _
      $region26: #{tpu_custom_call.1} parent=5 // pred_check_branch
        %177 = sbr.rel (%p174) target = $region28
      $region27: #{tpu_custom_call.1} parent=5 // pred_region
        %s178 = ssub.s32 %s17, 1
        %s179 = sand.u32 %s44, 1
        %s180 = scalar_lea.sflag [#allocation4], %s179
        %s181 = sand.u32 %s44, 1
        %s182 = smul.addr %s181, 4
        %s183 = scalar_lea.vmem [#allocation3], %s182
        // Predicated region
        $region29: #{tpu_custom_call.1} parent=27 // pred_check
          %p184 = pneg %p57
        $region30: #{tpu_custom_call.1} parent=27 // pred_check_branch
          %186 = sbr.rel (%p184) target = $region32
        $region31: #{tpu_custom_call.1} parent=27 // pred_region
          %187 = dma.done %s180, 64
        $region32: #{tpu_custom_call.1} parent=27 // pred_fallthru
          _
        %s188 = sand.u32 %s72, 1
        %s189 = scalar_lea.sflag [#allocation7], %s188
        %s190 = sand.u32 %s72, 1
        %s191 = smul.addr %s190, 256
        %s192 = scalar_lea.vmem [#allocation6], %s191
        // Predicated region
        $region33: #{tpu_custom_call.1} parent=27 // pred_check
          %p193 = pneg %p85
        $region34: #{tpu_custom_call.1} parent=27 // pred_check_branch
          %195 = sbr.rel (%p193) target = $region36
        $region35: #{tpu_custom_call.1} parent=27 // pred_region
          %196 = dma.done %s189, 4096
        $region36: #{tpu_custom_call.1} parent=27 // pred_fallthru
          _
        %s197 = sand.u32 %s44, 1
        %s198 = scalar_lea.sflag [#allocation4], %s197
        %s199 = sand.u32 %s44, 1
        %s200 = smul.addr %s199, 4
        %s201 = scalar_lea.vmem [#allocation3], %s200
        %p202 = pneg %p57
        %p203 = pneg %p54
        %s204 = sand.u32 %s72, 1
        %s205 = scalar_lea.sflag [#allocation7], %s204
        %s206 = sand.u32 %s72, 1
        %s207 = smul.addr %s206, 256
        %s208 = scalar_lea.vmem [#allocation6], %s207
        %p209 = pneg %p85
        %p210 = pneg %p82
        %p211 = pneg %p111
        %p212 = pneg %p108
        %s213 = sand.u32 %s98, 1
        %s214 = scalar_lea.sflag [#allocation5], %s213
        %s215 = sand.u32 %s98, 1
        %s216 = scalar_lea.vmem [#allocation8], %s215
        %s217 = sadd.s32 %s26, %s27
        %s218 = smul.u32 4, %s217
        %s219 = sadd.s32 %s26, %s27
        %s220 = smul.u32 64, %s219
        %p222 = scmp.eq.s32.totalorder %s27, 0
        // Predicated region
        $region37: #{tpu_custom_call.1} parent=27 // pred_check
          %p223 = pneg %p222
        $region38: #{tpu_custom_call.1} parent=27 // pred_check_branch
          %225 = sbr.rel (%p223) target = $region40
        $region39: #{tpu_custom_call.1} parent=27 // pred_region
          %226 = vst [vmem:[#allocation2] sm:$0x1] 0.0
        $region40: #{tpu_custom_call.1} parent=27 // pred_fallthru
          _
        %v227 = vld [vmem:[#allocation2] sm:$0x1]
        %v228 = vld [vmem:[%s183] sm:$0xf]
        %v229 = vld [vmem:[%s192] sm:$0xf]
        %v230 = vld [vmem:[%s192 + $0x4] sm:$0xf]
        %v231 = vld [vmem:[%s192 + $0x8] sm:$0xf]
        %v232 = vld [vmem:[%s192 + $0xc] sm:$0xf]
        %v233 = vld [vmem:[%s192 + $0x10] sm:$0xf]
        %v234 = vld [vmem:[%s192 + $0x14] sm:$0xf]
        %v235 = vld [vmem:[%s192 + $0x18] sm:$0xf]
        %v236 = vld [vmem:[%s192 + $0x1c] sm:$0xf]
        %v237 = vld [vmem:[%s192 + $0x20] sm:$0xf]
        %v238 = vld [vmem:[%s192 + $0x24] sm:$0xf]
        %v239 = vld [vmem:[%s192 + $0x28] sm:$0xf]
        %v240 = vld [vmem:[%s192 + $0x2c] sm:$0xf]
        %v241 = vld [vmem:[%s192 + $0x30] sm:$0xf]
        %v242 = vld [vmem:[%s192 + $0x34] sm:$0xf]
        %v243 = vld [vmem:[%s192 + $0x38] sm:$0xf]
        %v244 = vld [vmem:[%s192 + $0x3c] sm:$0xf]
        %v245 = vld [vmem:[%s192 + $0x40] sm:$0xf]
        %v246 = vld [vmem:[%s192 + $0x44] sm:$0xf]
        %v247 = vld [vmem:[%s192 + $0x48] sm:$0xf]
        %v248 = vld [vmem:[%s192 + $0x4c] sm:$0xf]
        %v249 = vld [vmem:[%s192 + $0x50] sm:$0xf]
        %v250 = vld [vmem:[%s192 + $0x54] sm:$0xf]
        %v251 = vld [vmem:[%s192 + $0x58] sm:$0xf]
        %v252 = vld [vmem:[%s192 + $0x5c] sm:$0xf]
        %v253 = vld [vmem:[%s192 + $0x60] sm:$0xf]
        %v254 = vld [vmem:[%s192 + $0x64] sm:$0xf]
        %v255 = vld [vmem:[%s192 + $0x68] sm:$0xf]
        %v256 = vld [vmem:[%s192 + $0x6c] sm:$0xf]
        %v257 = vld [vmem:[%s192 + $0x70] sm:$0xf]
        %v258 = vld [vmem:[%s192 + $0x74] sm:$0xf]
        %v259 = vld [vmem:[%s192 + $0x78] sm:$0xf]
        %v260 = vld [vmem:[%s192 + $0x7c] sm:$0xf]
        %v261 = vld [vmem:[%s192 + $0x80] sm:$0xf]
        %v262 = vld [vmem:[%s192 + $0x84] sm:$0xf]
        %v263 = vld [vmem:[%s192 + $0x88] sm:$0xf]
        %v264 = vld [vmem:[%s192 + $0x8c] sm:$0xf]
        %v265 = vld [vmem:[%s192 + $0x90] sm:$0xf]
        %v266 = vld [vmem:[%s192 + $0x94] sm:$0xf]
        %v267 = vld [vmem:[%s192 + $0x98] sm:$0xf]
        %v268 = vld [vmem:[%s192 + $0x9c] sm:$0xf]
        %v269 = vld [vmem:[%s192 + $0xa0] sm:$0xf]
        %v270 = vld [vmem:[%s192 + $0xa4] sm:$0xf]
        %v271 = vld [vmem:[%s192 + $0xa8] sm:$0xf]
        %v272 = vld [vmem:[%s192 + $0xac] sm:$0xf]
        %v273 = vld [vmem:[%s192 + $0xb0] sm:$0xf]
        %v274 = vld [vmem:[%s192 + $0xb4] sm:$0xf]
        %v275 = vld [vmem:[%s192 + $0xb8] sm:$0xf]
        %v276 = vld [vmem:[%s192 + $0xbc] sm:$0xf]
        %v277 = vld [vmem:[%s192 + $0xc0] sm:$0xf]
        %v278 = vld [vmem:[%s192 + $0xc4] sm:$0xf]
        %v279 = vld [vmem:[%s192 + $0xc8] sm:$0xf]
        %v280 = vld [vmem:[%s192 + $0xcc] sm:$0xf]
        %v281 = vld [vmem:[%s192 + $0xd0] sm:$0xf]
        %v282 = vld [vmem:[%s192 + $0xd4] sm:$0xf]
        %v283 = vld [vmem:[%s192 + $0xd8] sm:$0xf]
        %v284 = vld [vmem:[%s192 + $0xdc] sm:$0xf]
        %v285 = vld [vmem:[%s192 + $0xe0] sm:$0xf]
        %v286 = vld [vmem:[%s192 + $0xe4] sm:$0xf]
        %v287 = vld [vmem:[%s192 + $0xe8] sm:$0xf]
        %v288 = vld [vmem:[%s192 + $0xec] sm:$0xf]
        %v289 = vld [vmem:[%s192 + $0xf0] sm:$0xf]
        %v290 = vld [vmem:[%s192 + $0xf4] sm:$0xf]
        %v291 = vld [vmem:[%s192 + $0xf8] sm:$0xf]
        %v292 = vld [vmem:[%s192 + $0xfc] sm:$0xf]
        %v295 = vunpack.c.l.s4 1966171168
        %v296 = vunpack.c.0.s8 %v295
        %v297 = vlaneseq
        %v298 = vshrl.u32 %v297, 7
        %v299 = vsub.s32 %v296, %v298
        %v300 = vrot.slane %v228, %v299
        %v301 = vcombine.high %v300, %v300
        %v303 = vunpack.c.l.s4 1966171168
        %v304 = vunpack.c.0.s8 %v303
        %v305 = vlaneseq
        %v306 = vshrl.u32 %v305, 7
        %v307 = vsub.s32 %v304, %v306
        %v308 = vrot.slane %v300, %v307
        %v310 = vunpack.c.l.s4 1966171168
        %v311 = vunpack.c.0.s8 %v310
        %v312 = vlaneseq
        %v313 = vshrl.u32 %v312, 7
        %v314 = vsub.s32 %v311, %v313
        %v315 = vrot.slane %v301, %v314
        %v316 = vcombine.high %v308, %v308
        %v317 = vcombine.high %v315, %v315
        %v386 = vunpack.c.l.b16 %v229
        %v387 = vunpack.c.l.b16 %v230
        %v388 = vunpack.c.l.b16 %v231
        %v389 = vunpack.c.l.b16 %v232
        %v390 = vunpack.c.l.b16 %v233
        %v391 = vunpack.c.l.b16 %v234
        %v392 = vunpack.c.l.b16 %v235
        %v393 = vunpack.c.l.b16 %v236
        %v394 = vunpack.c.l.b16 %v237
        %v395 = vunpack.c.l.b16 %v238
        %v396 = vunpack.c.l.b16 %v239
        %v397 = vunpack.c.l.b16 %v240
        %v398 = vunpack.c.l.b16 %v241
        %v399 = vunpack.c.l.b16 %v242
        %v400 = vunpack.c.l.b16 %v243
        %v401 = vunpack.c.l.b16 %v244
        %v402 = vunpack.c.l.b16 %v245
        %v403 = vunpack.c.l.b16 %v246
        %v404 = vunpack.c.l.b16 %v247
        %v405 = vunpack.c.l.b16 %v248
        %v406 = vunpack.c.l.b16 %v249
        %v407 = vunpack.c.l.b16 %v250
        %v408 = vunpack.c.l.b16 %v251
        %v409 = vunpack.c.l.b16 %v252
        %v410 = vunpack.c.l.b16 %v253
        %v411 = vunpack.c.l.b16 %v254
        %v412 = vunpack.c.l.b16 %v255
        %v413 = vunpack.c.l.b16 %v256
        %v414 = vunpack.c.l.b16 %v257
        %v415 = vunpack.c.l.b16 %v258
        %v416 = vunpack.c.l.b16 %v259
        %v417 = vunpack.c.l.b16 %v260
        %v418 = vunpack.c.l.b16 %v261
        %v419 = vunpack.c.l.b16 %v262
        %v420 = vunpack.c.l.b16 %v263
        %v421 = vunpack.c.l.b16 %v264
        %v422 = vunpack.c.l.b16 %v265
        %v423 = vunpack.c.l.b16 %v266
        %v424 = vunpack.c.l.b16 %v267
        %v425 = vunpack.c.l.b16 %v268
        %v426 = vunpack.c.l.b16 %v269
        %v427 = vunpack.c.l.b16 %v270
        %v428 = vunpack.c.l.b16 %v271
        %v429 = vunpack.c.l.b16 %v272
        %v430 = vunpack.c.l.b16 %v273
        %v431 = vunpack.c.l.b16 %v274
        %v432 = vunpack.c.l.b16 %v275
        %v433 = vunpack.c.l.b16 %v276
        %v434 = vunpack.c.l.b16 %v277
        %v435 = vunpack.c.l.b16 %v278
        %v436 = vunpack.c.l.b16 %v279
        %v437 = vunpack.c.l.b16 %v280
        %v438 = vunpack.c.l.b16 %v281
        %v439 = vunpack.c.l.b16 %v282
        %v440 = vunpack.c.l.b16 %v283
        %v441 = vunpack.c.l.b16 %v284
        %v442 = vunpack.c.l.b16 %v285
        %v443 = vunpack.c.l.b16 %v286
        %v444 = vunpack.c.l.b16 %v287
        %v445 = vunpack.c.l.b16 %v288
        %v446 = vunpack.c.l.b16 %v289
        %v447 = vunpack.c.l.b16 %v290
        %v448 = vunpack.c.l.b16 %v291
        %v449 = vunpack.c.l.b16 %v292
        %v450 = vpack.c.b16 %v387, %v386
        %v451 = vpack.c.b16 %v389, %v388
        %v452 = vpack.c.b16 %v391, %v390
        %v453 = vpack.c.b16 %v393, %v392
        %v454 = vpack.c.b16 %v395, %v394
        %v455 = vpack.c.b16 %v397, %v396
        %v456 = vpack.c.b16 %v399, %v398
        %v457 = vpack.c.b16 %v401, %v400
        %v458 = vpack.c.b16 %v403, %v402
        %v459 = vpack.c.b16 %v405, %v404
        %v460 = vpack.c.b16 %v407, %v406
        %v461 = vpack.c.b16 %v409, %v408
        %v462 = vpack.c.b16 %v411, %v410
        %v463 = vpack.c.b16 %v413, %v412
        %v464 = vpack.c.b16 %v415, %v414
        %v465 = vpack.c.b16 %v417, %v416
        %v466 = vpack.c.b16 %v419, %v418
        %v467 = vpack.c.b16 %v421, %v420
        %v468 = vpack.c.b16 %v423, %v422
        %v469 = vpack.c.b16 %v425, %v424
        %v470 = vpack.c.b16 %v427, %v426
        %v471 = vpack.c.b16 %v429, %v428
        %v472 = vpack.c.b16 %v431, %v430
        %v473 = vpack.c.b16 %v433, %v432
        %v474 = vpack.c.b16 %v435, %v434
        %v475 = vpack.c.b16 %v437, %v436
        %v476 = vpack.c.b16 %v439, %v438
        %v477 = vpack.c.b16 %v441, %v440
        %v478 = vpack.c.b16 %v443, %v442
        %v479 = vpack.c.b16 %v445, %v444
        %v480 = vpack.c.b16 %v447, %v446
        %v481 = vpack.c.b16 %v449, %v448
        %514 = vmatprep.subr.bf16.mxu0 0
        %515 = vmatpush1.bf16.msra.mxu0 %v450
        %516 = vmatprep.subr.bf16.mxu0 0
        %517 = vmatpush1.bf16.msra.mxu0 %v451
        %518 = vmatprep.subr.bf16.mxu0 0
        %519 = vmatpush1.bf16.msra.mxu0 %v452
        %520 = vmatprep.subr.bf16.mxu0 0
        %521 = vmatpush1.bf16.msra.mxu0 %v453
        %522 = vmatprep.subr.bf16.mxu0 0
        %523 = vmatpush1.bf16.msra.mxu0 %v454
        %524 = vmatprep.subr.bf16.mxu0 0
        %525 = vmatpush1.bf16.msra.mxu0 %v455
        %526 = vmatprep.subr.bf16.mxu0 0
        %527 = vmatpush1.bf16.msra.mxu0 %v456
        %528 = vmatprep.subr.bf16.mxu0 0
        %529 = vmatpush1.bf16.msra.mxu0 %v457
        %530 = vmatprep.subr.bf16.mxu0 0
        %531 = vmatpush1.bf16.msra.mxu0 %v458
        %532 = vmatprep.subr.bf16.mxu0 0
        %533 = vmatpush1.bf16.msra.mxu0 %v459
        %534 = vmatprep.subr.bf16.mxu0 0
        %535 = vmatpush1.bf16.msra.mxu0 %v460
        %536 = vmatprep.subr.bf16.mxu0 0
        %537 = vmatpush1.bf16.msra.mxu0 %v461
        %538 = vmatprep.subr.bf16.mxu0 0
        %539 = vmatpush1.bf16.msra.mxu0 %v462
        %540 = vmatprep.subr.bf16.mxu0 0
        %541 = vmatpush1.bf16.msra.mxu0 %v463
        %542 = vmatprep.subr.bf16.mxu0 0
        %543 = vmatpush1.bf16.msra.mxu0 %v464
        %544 = vmatprep.subr.bf16.mxu0 0
        %545 = vmatpush1.bf16.msra.mxu0 %v465
        %546 = vmatprep.mubr.bf16.mxu0 %v315
        %547 = vmatmul.mubr.bf16.gmra.mrb[0].mxu0 %v308
        %v548 = vpop.f32.mrb[0].mxu0
        %v549 = vadd.f32 0.0, %v548
        %v550 = vpop.f32.mrb[0].mxu0
        %v551 = vpop.f32.mrb[0].mxu0
        %v552 = vpop.f32.mrb[0].mxu0
        %553 = vdwg.mxu0
        %554 = vmatprep.subr.bf16.mxu0 0
        %555 = vmatpush1.bf16.msra.mxu0 %v466
        %556 = vmatprep.subr.bf16.mxu0 0
        %557 = vmatpush1.bf16.msra.mxu0 %v467
        %558 = vmatprep.subr.bf16.mxu0 0
        %559 = vmatpush1.bf16.msra.mxu0 %v468
        %560 = vmatprep.subr.bf16.mxu0 0
        %561 = vmatpush1.bf16.msra.mxu0 %v469
        %562 = vmatprep.subr.bf16.mxu0 0
        %563 = vmatpush1.bf16.msra.mxu0 %v470
        %564 = vmatprep.subr.bf16.mxu0 0
        %565 = vmatpush1.bf16.msra.mxu0 %v471
        %566 = vmatprep.subr.bf16.mxu0 0
        %567 = vmatpush1.bf16.msra.mxu0 %v472
        %568 = vmatprep.subr.bf16.mxu0 0
        %569 = vmatpush1.bf16.msra.mxu0 %v473
        %570 = vmatprep.subr.bf16.mxu0 0
        %571 = vmatpush1.bf16.msra.mxu0 %v474
        %572 = vmatprep.subr.bf16.mxu0 0
        %573 = vmatpush1.bf16.msra.mxu0 %v475
        %574 = vmatprep.subr.bf16.mxu0 0
        %575 = vmatpush1.bf16.msra.mxu0 %v476
        %576 = vmatprep.subr.bf16.mxu0 0
        %577 = vmatpush1.bf16.msra.mxu0 %v477
        %578 = vmatprep.subr.bf16.mxu0 0
        %579 = vmatpush1.bf16.msra.mxu0 %v478
        %580 = vmatprep.subr.bf16.mxu0 0
        %581 = vmatpush1.bf16.msra.mxu0 %v479
        %582 = vmatprep.subr.bf16.mxu0 0
        %583 = vmatpush1.bf16.msra.mxu0 %v480
        %584 = vmatprep.subr.bf16.mxu0 0
        %585 = vmatpush1.bf16.msra.mxu0 %v481
        %586 = vmatprep.mubr.bf16.mxu0 %v317
        %587 = vmatmul.mubr.bf16.gmra.mrb[0].mxu0 %v316
        %v588 = vpop.f32.mrb[0].mxu0
        %v589 = vadd.f32 %v549, %v588
        %v590 = vpop.f32.mrb[0].mxu0
        %v591 = vpop.f32.mrb[0].mxu0
        %v592 = vpop.f32.mrb[0].mxu0
        %593 = vdwg.mxu0
        %v594 = vadd.f32 %v227, %v589
        %595 = vst [vmem:[#allocation2] sm:$0x1] %v594
        // Predicated region
        $region41: #{tpu_custom_call.1} parent=27 // pred_check
          %p596 = pneg %p222
        $region42: #{tpu_custom_call.1} parent=27 // pred_check_branch
          %598 = sbr.rel (%p596) target = $region44
        $region43: #{tpu_custom_call.1} parent=27 // pred_region
          %v599 = vld [vmem:[#allocation2] sm:$0x1]
          %600 = vst [vmem:[%s216] sm:$0x1] %v599
        $region44: #{tpu_custom_call.1} parent=27 // pred_fallthru
          _
        %s601 = sand.u32 %s98, 1
        %s602 = scalar_lea.sflag [#allocation5], %s601
        %s603 = sand.u32 %s98, 1
        %s604 = scalar_lea.vmem [#allocation8], %s603
        // Predicated region
        $region45: #{tpu_custom_call.1} parent=27 // pred_check
          %p605 = pneg %p108
        $region46: #{tpu_custom_call.1} parent=27 // pred_check_branch
          %607 = sbr.rel (%p605) target = $region48
        $region47: #{tpu_custom_call.1} parent=27 // pred_region
          %s609 = ssub.s32 16, 16
          %610 = vsyncadd %s602, %s609
          %s611 = smul.addr %s26, 16
          %s612 = scalar_lea.hbm %s2, %s611
          %s614 = sshll.u32 %s604, 4
          %s615 = int_to_ptr.vmem [resolvable:$true] %s614
          %617 = dma.vmem_to_hbm [thread:$0]  %s615, 16, %s612, %s602
        $region48: #{tpu_custom_call.1} parent=27 // pred_fallthru
          _
      $region28: #{tpu_custom_call.1} parent=5 // pred_fallthru
        _
      %p618 = scmp.le.s32.totalorder 2, %s17
      // Predicated region
      $region49: #{tpu_custom_call.1} parent=5 // pred_check
        %p619 = pneg %p618
      $region50: #{tpu_custom_call.1} parent=5 // pred_check_branch
        %621 = sbr.rel (%p619) target = $region52
      $region51: #{tpu_custom_call.1} parent=5 // pred_region
        %s622 = ssub.s32 %s17, 2
        // Predicated region
        $region53: #{tpu_custom_call.1} parent=51 // pred_check
          %p623 = pneg %p114
        $region54: #{tpu_custom_call.1} parent=51 // pred_check_branch
          %625 = sbr.rel (%p623) target = $region56
        $region55: #{tpu_custom_call.1} parent=51 // pred_region
          %s626 = sand.u32 %s99, 1
          %s627 = scalar_lea.sflag [#allocation5], %s626
          %s628 = sand.u32 %s99, 1
          %s629 = scalar_lea.vmem [#allocation8], %s628
          %630 = dma.done %s627, 16
        $region56: #{tpu_custom_call.1} parent=51 // pred_fallthru
          _
      $region52: #{tpu_custom_call.1} parent=5 // pred_fallthru
        _
    $region6: #{tpu_custom_call.1} parent=1 // loop_footer
      %s21 = sadd.s32 1, %s17
    $region7: #{tpu_custom_call.1} parent=1 // loop_footer_branch
      %16 = sbr.rel target = $region3
    $region8: #{tpu_custom_call.1} parent=1 // loop_exit
      _
    %631 = vsyncpa [#allocation4], 1
    %s632 = scalar_lea.sflag [#allocation4], 1
    %633 = vsyncpa %s632, 1
    %634 = vsyncpa [#allocation7], 1
    %s635 = scalar_lea.sflag [#allocation7], 1
    %636 = vsyncpa %s635, 1
    %637 = vsyncpa [#allocation5], 1
    %s638 = scalar_lea.sflag [#allocation5], 1
    %639 = vsyncpa %s638, 1

</llo_original>
